<compile_context>
chip_gen: v6e
topology: v6e:2x2x1
jax: 0.10.0
libtpu: 0.0.40
codegen_flags: <defaults>
</compile_context>

<pallas_src>
import jax
import jax.numpy as jnp
from jax.experimental import pallas as pl
from jax.experimental.pallas import tpu as pltpu


def _merge_linear_kernel(x1_ref, x2_ref, w1_ref, w2_ref, b_ref, o_ref):
    # Two MXU matmuls into a single f32 accumulator + fused bias epilogue (all in VMEM).
    acc = jnp.dot(x1_ref[...], w1_ref[...], preferred_element_type=jnp.float32)
    acc = acc + jnp.dot(x2_ref[...], w2_ref[...], preferred_element_type=jnp.float32)
    o_ref[...] = (acc + b_ref[...]).astype(o_ref.dtype)


def prepare_merge_linear_params(w1, b1, w2, b2, *, param_dtype=None):
    """One-time parameter prep (do at load time, NOT on the forward hot path).

    w_i: [out, in_i] (PyTorch layout), b_i: [out].
    Returns
      w1p: [in_1, out] = W1.T * 0.5      (0.5 folded in; exact for any dtype)
      w2p: [in_2, out] = W2.T * 0.5
      b  : [1, out]    = (b1 + b2) * 0.5 (f32)
    so that  forward(x1, x2) = x1 @ w1p + x2 @ w2p + b.
    Pass param_dtype=jnp.bfloat16 for bf16 weights (f32 MXU accumulation is kept).
    """
    w1p = w1.T * 0.5
    w2p = w2.T * 0.5
    if param_dtype is not None:
        w1p = w1p.astype(param_dtype)
        w2p = w2p.astype(param_dtype)
    b = ((b1.astype(jnp.float32) + b2.astype(jnp.float32)) * 0.5).reshape(1, -1)
    return w1p, w2p, b


def _pick_tile(dim, candidates):
    # Prefer the largest candidate that exactly divides `dim`.
    for c in candidates:
        if c <= dim and dim % c == 0:
            return c
    # Nothing divides: largest aligned candidate <= dim; the cdiv grid masks the
    # partial last block (keeps the steady-state large-tile pipeline).
    for c in candidates:
        if c <= dim:
            return c
    # dim smaller than the smallest candidate: use the full (unblocked) dimension.
    return dim


# Keep double-buffered per-step tiles comfortably inside v7x's 64 MiB VMEM.
_VMEM_TILE_BUDGET = 40 << 20


def merge_linear(x1, x2, w1p, w2p, b, *, out_dtype=None, block_m=None, block_n=None):
    """x1: [B, in_1], x2: [B, in_2]; (w1p, w2p, b) from prepare_merge_linear_params.

    Note: out_dtype defaults to x1.dtype, so bf16 inputs produce bf16 outputs.
    """
    B, K1 = x1.shape
    B2, K2 = x2.shape
    assert B2 == B
    assert w1p.shape[0] == K1 and w2p.shape[0] == K2
    N = w1p.shape[1]
    assert w2p.shape[1] == N and b.shape == (1, N)
    if out_dtype is None:
        out_dtype = x1.dtype

    x_b = jnp.dtype(x1.dtype).itemsize
    w_b = jnp.dtype(w1p.dtype).itemsize
    o_b = jnp.dtype(out_dtype).itemsize

    # Big tiles first (per-grid-step overhead ~0.35 us; lane-dense unmasked stores).
    bm = block_m if block_m is not None else _pick_tile(
        B, (2048, 1024, 512, 256, 128, 64, 32, 16, 8))
    bn = block_n if block_n is not None else _pick_tile(
        N, (1024, 512, 256, 128))

    # Double-buffered per-step VMEM footprint (x1+x2 tiles, W1'+W2' tiles, bias, out).
    def vmem_need(m, n):
        return 2 * (m * (K1 + K2) * x_b + (K1 + K2) * n * w_b + n * 4 + m * n * o_b)

    if block_m is None:
        while vmem_need(bm, bn) > _VMEM_TILE_BUDGET and bm > 8:
            bm = max(8, bm // 2)
    if block_n is None:
        while vmem_need(bm, bn) > _VMEM_TILE_BUDGET and bn > 128:
            bn = max(128, bn // 2)

    grid = (pl.cdiv(N, bn), pl.cdiv(B, bm))   # out-tile OUTER, batch-tile INNER

    nbytes = lambda a: a.size * jnp.dtype(a.dtype).itemsize
    cost = pl.CostEstimate(
        flops=2 * B * (K1 + K2) * N,
        transcendentals=0,
        bytes_accessed=(nbytes(x1) + nbytes(x2) + nbytes(w1p) + nbytes(w2p)
                        + nbytes(b) + B * N * o_b),
    )

    vmem_limit = int(min(64 << 20, max(32 << 20, int(vmem_need(bm, bn) * 1.5))))

    return pl.pallas_call(
        _merge_linear_kernel,
        out_shape=jax.ShapeDtypeStruct((B, N), out_dtype),
        grid=grid,
        in_specs=[
            pl.BlockSpec((bm, K1), lambda j, i: (i, 0)),   # x1: new tile per batch step
            pl.BlockSpec((bm, K2), lambda j, i: (i, 0)),   # x2: new tile per batch step
            pl.BlockSpec((K1, bn), lambda j, i: (0, j)),   # W1': VMEM-resident across batch axis
            pl.BlockSpec((K2, bn), lambda j, i: (0, j)),   # W2': VMEM-resident across batch axis
            pl.BlockSpec((1, bn), lambda j, i: (0, j)),    # pre-combined (b1 + b2) / 2
        ],
        out_specs=pl.BlockSpec((bm, bn), lambda j, i: (i, j)),
        compiler_params=pltpu.CompilerParams(
            dimension_semantics=("parallel", "parallel"),
            vmem_limit_bytes=vmem_limit),
        cost_estimate=cost,
    )(x1, x2, w1p, w2p, b)


def init_linear_params(key, in_features, out_features):
    # Deterministic init mimicking PyTorch nn.Linear default:
    # U(-1/sqrt(in), 1/sqrt(in)) for both weight and bias.
    kw, kb = jax.random.split(key)
    bound = 1.0 / jnp.sqrt(jnp.float32(in_features))
    w = jax.random.uniform(kw, (out_features, in_features), jnp.float32,
                           minval=-bound, maxval=bound)
    b = jax.random.uniform(kb, (out_features,), jnp.float32,
                           minval=-bound, maxval=bound)
    return w, b


if __name__ == "__main__":
    key = jax.random.PRNGKey(0)
    k_x1, k_x2, k_l1, k_l2 = jax.random.split(key, 4)

    B, in_1, in_2, out = 64, 32, 48, 256

    x1 = jax.random.normal(k_x1, (B, in_1), jnp.float32)
    x2 = jax.random.normal(k_x2, (B, in_2), jnp.float32)
    w1, b1 = init_linear_params(k_l1, in_1, out)
    w2, b2 = init_linear_params(k_l2, in_2, out)

    # One-time parameter fusion (transpose + 0.5-fold + bias combine), NOT per call.
    w1p, w2p, b = prepare_merge_linear_params(w1, b1, w2, b2)

    # Reference in plain JAX (matches the PyTorch module semantics exactly).
    y_ref = ((x1 @ w1.T + b1) + (x2 @ w2.T + b2)) / 2.0

    # Auto-tiled path (single tile at these small demo shapes).
    y_auto = jax.block_until_ready(merge_linear(x1, x2, w1p, w2p, b))
    assert y_auto.shape == (B, out)
    assert jnp.allclose(y_auto, y_ref, atol=1e-5, rtol=1e-5)

    # Force a multi-tile grid (grid = (256/128, 64/16) = (2, 4)) so the tiled,
    # weight-resident pipelined code path is also exercised.
    y_tiled = jax.block_until_ready(
        merge_linear(x1, x2, w1p, w2p, b, block_m=16, block_n=128))
    assert jnp.allclose(y_tiled, y_ref, atol=1e-5, rtol=1e-5)

    print("KERNEL_OK")
</pallas_src>

<mosaic_0001>
module attributes {stable_mosaic.version = 11 : i64} {
  func.func @_merge_linear_kernel(%arg0: i32, %arg1: i32, %arg2: memref<64x32xf32, #tpu.memory_space<vmem>>, %arg3: memref<64x48xf32, #tpu.memory_space<vmem>>, %arg4: memref<32x256xf32, #tpu.memory_space<vmem>>, %arg5: memref<48x256xf32, #tpu.memory_space<vmem>>, %arg6: memref<1x256xf32, #tpu.memory_space<vmem>>, %arg7: memref<64x256xf32, #tpu.memory_space<vmem>>) attributes {dimension_semantics = [#tpu.dimension_semantics<parallel>, #tpu.dimension_semantics<parallel>], iteration_bounds = array<i64: 1, 1>, scalar_prefetch = 0 : i64, scratch_operands = 0 : i64, tpu.core_type = #tpu.core_type<tc>, window_params = [{transform_indices = @transform_0, window_bounds = array<i64: 64, 32>}, {transform_indices = @transform_1, window_bounds = array<i64: 64, 48>}, {transform_indices = @transform_2, window_bounds = array<i64: 32, 256>}, {transform_indices = @transform_3, window_bounds = array<i64: 48, 256>}, {transform_indices = @transform_4, window_bounds = array<i64: 1, 256>}, {transform_indices = @transform_5, window_bounds = array<i64: 64, 256>}]} {
    %c0 = arith.constant 0 : index
    %c0_0 = arith.constant 0 : index
    %0 = vector.load %arg2[%c0, %c0_0] : memref<64x32xf32, #tpu.memory_space<vmem>>, vector<64x32xf32>
    %c0_1 = arith.constant 0 : index
    %c0_2 = arith.constant 0 : index
    %1 = vector.load %arg4[%c0_1, %c0_2] : memref<32x256xf32, #tpu.memory_space<vmem>>, vector<32x256xf32>
    %cst = arith.constant dense<0.000000e+00> : vector<64x256xf32>
    %2 = tpu.matmul %0, %1, %cst {dimension_numbers = #tpu.dot_dimension_numbers<[1], [0], [0], [1], [0, 0, 1, 1], [], []>} : vector<64x32xf32>, vector<32x256xf32>, vector<64x256xf32> -> vector<64x256xf32>
    %c0_3 = arith.constant 0 : index
    %c0_4 = arith.constant 0 : index
    %3 = vector.load %arg3[%c0_3, %c0_4] : memref<64x48xf32, #tpu.memory_space<vmem>>, vector<64x48xf32>
    %c0_5 = arith.constant 0 : index
    %c0_6 = arith.constant 0 : index
    %4 = vector.load %arg5[%c0_5, %c0_6] : memref<48x256xf32, #tpu.memory_space<vmem>>, vector<48x256xf32>
    %cst_7 = arith.constant dense<0.000000e+00> : vector<64x256xf32>
    %5 = tpu.matmul %3, %4, %cst_7 {dimension_numbers = #tpu.dot_dimension_numbers<[1], [0], [0], [1], [0, 0, 1, 1], [], []>} : vector<64x48xf32>, vector<48x256xf32>, vector<64x256xf32> -> vector<64x256xf32>
    %6 = arith.addf %2, %5 : vector<64x256xf32>
    %c0_8 = arith.constant 0 : index
    %c0_9 = arith.constant 0 : index
    %7 = vector.load %arg6[%c0_8, %c0_9] : memref<1x256xf32, #tpu.memory_space<vmem>>, vector<1x256xf32>
    %8 = vector.broadcast %7 : vector<1x256xf32> to vector<64x256xf32>
    %9 = arith.addf %6, %8 : vector<64x256xf32>
    %c0_10 = arith.constant 0 : index
    %c0_11 = arith.constant 0 : index
    %10 = vector.load %arg7[%c0_10, %c0_11] : memref<64x256xf32, #tpu.memory_space<vmem>>, vector<64x256xf32>
    tpu.vector_store %arg7[%c0_10, %c0_11], %9 {strides = array<i32>} : memref<64x256xf32, #tpu.memory_space<vmem>>, vector<64x256xf32>,
    return
  }
  func.func @transform_0(%arg0: i32, %arg1: i32) -> (i32, i32) {
    %c0_i32 = arith.constant 0 : i32
    %c0_i32_0 = arith.constant 0 : i32
    return %arg1, %c0_i32 : i32, i32
  }
  func.func @transform_1(%arg0: i32, %arg1: i32) -> (i32, i32) {
    %c0_i32 = arith.constant 0 : i32
    %c0_i32_0 = arith.constant 0 : i32
    return %arg1, %c0_i32 : i32, i32
  }
  func.func @transform_2(%arg0: i32, %arg1: i32) -> (i32, i32) {
    %c0_i32 = arith.constant 0 : i32
    %c0_i32_0 = arith.constant 0 : i32
    return %c0_i32, %arg0 : i32, i32
  }
  func.func @transform_3(%arg0: i32, %arg1: i32) -> (i32, i32) {
    %c0_i32 = arith.constant 0 : i32
    %c0_i32_0 = arith.constant 0 : i32
    return %c0_i32, %arg0 : i32, i32
  }
  func.func @transform_4(%arg0: i32, %arg1: i32) -> (i32, i32) {
    %c0_i32 = arith.constant 0 : i32
    %c0_i32_0 = arith.constant 0 : i32
    return %c0_i32, %arg0 : i32, i32
  }
  func.func @transform_5(%arg0: i32, %arg1: i32) -> (i32, i32) {
    %c0_i32 = arith.constant 0 : i32
    return %arg1, %arg0 : i32, i32
  }
}

</mosaic_0001>

<llo_original>
// kernel: tpu_custom_call.1
$region0: #{tpu_custom_call.1}
  #allocation0 [shape = 'u32[]', space=smem, size = 0x4, offset = 0x4, fixed_abs, tag = 'smem constant byte address 0x4 - core index']
  #allocation1 [shape = 'u32[144,128]{1,0:T(1,128)}', space=vmem, size = 0x12000, scoped, tag = 'internal scratch']
  %s0 = inlined_call_operand.vmem [shape: f32[64,32], index: 0, kind: input, shape index: {}]
  %s1 = inlined_call_operand.vmem [shape: f32[64,48], index: 1, kind: input, shape index: {}]
  %s2 = inlined_call_operand.vmem [shape: f32[32,256], index: 2, kind: input, shape index: {}]
  %s3 = inlined_call_operand.vmem [shape: f32[48,256], index: 3, kind: input, shape index: {}]
  %s4 = inlined_call_operand.vmem [shape: f32[1,256], index: 4, kind: input, shape index: {}]
  %s5 = inlined_call_operand.hbm [shape: f32[64,256], index: 5, kind: output, shape index: {}]
  %s6 = sld [smem:[#allocation0]]
  $region30: #{tpu_custom_call.1} parent=0
    _
  %s8 = ssub.s32 1, %s6
  %s9 = scalar_select 0, %s8, %s6
  $region1: #{tpu_custom_call.1} parent=0
    #allocation2 [shape = 'u8[65536]{0}', space=vmem, size = 0x10000, scoped, tag = 'output window, operand 0, single buffered']
    #allocation3 [shape = 's32[1]{0}', space=sflag, size = 0x4, scoped, tag = 'scoped memory for tpu_custom_call.1']
    %10 = vsyncpa [#allocation3], 0
    // Predicated region
    $region2: #{tpu_custom_call.1} parent=1 // pred_check
      _
    $region3: #{tpu_custom_call.1} parent=1 // pred_check_branch
      %12 = sbr.rel (0) target = $region5
    $region4: #{tpu_custom_call.1} parent=1 // pred_region
      _
    $region5: #{tpu_custom_call.1} parent=1 // pred_fallthru
      _
    // Predicated region
    $region6: #{tpu_custom_call.1} parent=1 // pred_check
      _
    $region7: #{tpu_custom_call.1} parent=1 // pred_check_branch
      %14 = sbr.rel (0) target = $region9
    $region8: #{tpu_custom_call.1} parent=1 // pred_region
      _
    $region9: #{tpu_custom_call.1} parent=1 // pred_fallthru
      _
    // Predicated region
    $region10: #{tpu_custom_call.1} parent=1 // pred_check
      _
    $region11: #{tpu_custom_call.1} parent=1 // pred_check_branch
      %16 = sbr.rel (0) target = $region13
    $region12: #{tpu_custom_call.1} parent=1 // pred_region
      _
    $region13: #{tpu_custom_call.1} parent=1 // pred_fallthru
      _
    // Predicated region
    $region14: #{tpu_custom_call.1} parent=1 // pred_check
      _
    $region15: #{tpu_custom_call.1} parent=1 // pred_check_branch
      %18 = sbr.rel (0) target = $region17
    $region16: #{tpu_custom_call.1} parent=1 // pred_region
      _
    $region17: #{tpu_custom_call.1} parent=1 // pred_fallthru
      _
    // Predicated region
    $region18: #{tpu_custom_call.1} parent=1 // pred_check
      _
    $region19: #{tpu_custom_call.1} parent=1 // pred_check_branch
      %20 = sbr.rel (0) target = $region21
    $region20: #{tpu_custom_call.1} parent=1 // pred_region
      _
    $region21: #{tpu_custom_call.1} parent=1 // pred_fallthru
      _
    %v21 = vld [vmem:[%s0] sm:$0xff]
    %v22 = vld [vmem:[%s0 + $0x8] sm:$0xff]
    %v23 = vld [vmem:[%s0 + $0x10] sm:$0xff]
    %v24 = vld [vmem:[%s0 + $0x18] sm:$0xff]
    %v25 = vld [vmem:[%s0 + $0x20] sm:$0xff]
    %v26 = vld [vmem:[%s0 + $0x28] sm:$0xff]
    %v27 = vld [vmem:[%s0 + $0x30] sm:$0xff]
    %v28 = vld [vmem:[%s0 + $0x38] sm:$0xff]
    %v29 = vld [vmem:[%s2] sm:$0xff]
    %v30 = vld [vmem:[%s2 + $0x8] sm:$0xff]
    %v31 = vld [vmem:[%s2 + $0x10] sm:$0xff]
    %v32 = vld [vmem:[%s2 + $0x18] sm:$0xff]
    %v33 = vld [vmem:[%s2 + $0x20] sm:$0xff]
    %v34 = vld [vmem:[%s2 + $0x28] sm:$0xff]
    %v35 = vld [vmem:[%s2 + $0x30] sm:$0xff]
    %v36 = vld [vmem:[%s2 + $0x38] sm:$0xff]
    %v37 = vld [vmem:[%s1] sm:$0xff]
    %v38 = vld [vmem:[%s1 + $0x8] sm:$0xff]
    %v39 = vld [vmem:[%s1 + $0x10] sm:$0xff]
    %v40 = vld [vmem:[%s1 + $0x18] sm:$0xff]
    %v41 = vld [vmem:[%s1 + $0x20] sm:$0xff]
    %v42 = vld [vmem:[%s1 + $0x28] sm:$0xff]
    %v43 = vld [vmem:[%s1 + $0x30] sm:$0xff]
    %v44 = vld [vmem:[%s1 + $0x38] sm:$0xff]
    %v45 = vld [vmem:[%s3] sm:$0xff]
    %v46 = vld [vmem:[%s3 + $0x8] sm:$0xff]
    %v47 = vld [vmem:[%s3 + $0x10] sm:$0xff]
    %v48 = vld [vmem:[%s3 + $0x18] sm:$0xff]
    %v49 = vld [vmem:[%s3 + $0x20] sm:$0xff]
    %v50 = vld [vmem:[%s3 + $0x28] sm:$0xff]
    %v51 = vld [vmem:[%s3 + $0x30] sm:$0xff]
    %v52 = vld [vmem:[%s3 + $0x38] sm:$0xff]
    %v53 = vld [vmem:[%s3 + $0x40] sm:$0xff]
    %v54 = vld [vmem:[%s3 + $0x48] sm:$0xff]
    %v55 = vld [vmem:[%s3 + $0x50] sm:$0xff]
    %v56 = vld [vmem:[%s3 + $0x58] sm:$0xff]
    %vm57 = vcmask 392192
    %v59 = vsel %vm57, %v37, 0
    %v62 = vsel %vm57, %v38, 0
    %v65 = vsel %vm57, %v39, 0
    %v68 = vsel %vm57, %v40, 0
    %v71 = vsel %vm57, %v41, 0
    %v74 = vsel %vm57, %v42, 0
    %v77 = vsel %vm57, %v43, 0
    %v80 = vsel %vm57, %v44, 0
    %82 = vmatprep.subr.mxu0 0.0
    %83 = vmatpush1.msra.mxu0 0.0
    %84 = vmatprep.subr.mxu0 0.0
    %85 = vmatpush1.msra.mxu0 0.0
    %86 = vmatprep.subr.mxu0 0.0
    %87 = vmatpush1.msra.mxu0 0.0
    %88 = vmatprep.subr.mxu0 0.0
    %89 = vmatpush1.msra.mxu0 0.0
    %90 = vmatprep.subr.mxu0 0.0
    %91 = vmatpush1.msra.mxu0 0.0
    %92 = vmatprep.subr.mxu0 0.0
    %93 = vmatpush1.msra.mxu0 0.0
    %94 = vmatprep.subr.mxu0 0.0
    %95 = vmatpush1.msra.mxu0 0.0
    %96 = vmatprep.subr.mxu0 0.0
    %97 = vmatpush1.msra.mxu0 0.0
    %98 = vmatprep.subr.mxu0 0.0
    %99 = vmatpush1.msra.mxu0 0.0
    %100 = vmatprep.subr.mxu0 0.0
    %101 = vmatpush1.msra.mxu0 0.0
    %102 = vmatprep.subr.mxu0 %v56
    %103 = vmatpush1.msra.mxu0 %v55
    %104 = vmatprep.subr.mxu0 %v54
    %105 = vmatpush1.msra.mxu0 %v53
    %106 = vmatprep.subr.mxu0 %v52
    %107 = vmatpush1.msra.mxu0 %v51
    %108 = vmatprep.subr.mxu0 %v50
    %109 = vmatpush1.msra.mxu0 %v49
    %110 = vmatprep.subr.mxu0 %v48
    %111 = vmatpush1.msra.mxu0 %v47
    %112 = vmatprep.subr.mxu0 %v46
    %113 = vmatpush1.msra.mxu0 %v45
    %114 = vmatprep.subr.mxu0 0.0
    %115 = vmatpush2.msra.mxu0 0.0
    %116 = vmatprep.subr.mxu0 0.0
    %117 = vmatpush2.msra.mxu0 0.0
    %118 = vmatprep.subr.mxu0 0.0
    %119 = vmatpush2.msra.mxu0 0.0
    %120 = vmatprep.subr.mxu0 0.0
    %121 = vmatpush2.msra.mxu0 0.0
    %122 = vmatprep.subr.mxu0 0.0
    %123 = vmatpush2.msra.mxu0 0.0
    %124 = vmatprep.subr.mxu0 0.0
    %125 = vmatpush2.msra.mxu0 0.0
    %126 = vmatprep.subr.mxu0 0.0
    %127 = vmatpush2.msra.mxu0 0.0
    %128 = vmatprep.subr.mxu0 0.0
    %129 = vmatpush2.msra.mxu0 0.0
    %130 = vmatprep.subr.mxu0 0.0
    %131 = vmatpush2.msra.mxu0 0.0
    %132 = vmatprep.subr.mxu0 0.0
    %133 = vmatpush2.msra.mxu0 0.0
    %134 = vmatprep.subr.mxu0 0.0
    %135 = vmatpush2.msra.mxu0 0.0
    %136 = vmatprep.subr.mxu0 0.0
    %137 = vmatpush2.msra.mxu0 0.0
    %138 = vmatprep.subr.mxu0 0.0
    %139 = vmatpush2.msra.mxu0 0.0
    %140 = vmatprep.subr.mxu0 0.0
    %141 = vmatpush2.msra.mxu0 0.0
    %142 = vmatprep.subr.mxu0 0.0
    %143 = vmatpush2.msra.mxu0 0.0
    %144 = vmatprep.subr.mxu0 0.0
    %145 = vmatpush2.msra.mxu0 0.0
    %146 = vmatprep.mubr.f32.mxu0 0.0
    %147 = vmatmul.mubr.f32.gmra.mxu0 %v59
    %v148 = vpop.f32.mrf.mxu0
    %v149 = vadd.f32 0.0, %v148
    %v150 = vpop.f32.mrf.mxu0
    %v151 = vadd.f32 0.0, %v150
    %152 = vmatprep.mubr.f32.mxu0 0.0
    %153 = vmatmul.mubr.f32.gmra.mxu0 %v62
    %v154 = vpop.f32.mrf.mxu0
    %v155 = vadd.f32 0.0, %v154
    %v156 = vpop.f32.mrf.mxu0
    %v157 = vadd.f32 0.0, %v156
    %158 = vmatprep.mubr.f32.mxu0 0.0
    %159 = vmatmul.mubr.f32.gmra.mxu0 %v65
    %v160 = vpop.f32.mrf.mxu0
    %v161 = vadd.f32 0.0, %v160
    %v162 = vpop.f32.mrf.mxu0
    %v163 = vadd.f32 0.0, %v162
    %164 = vmatprep.mubr.f32.mxu0 0.0
    %165 = vmatmul.mubr.f32.gmra.mxu0 %v68
    %v166 = vpop.f32.mrf.mxu0
    %v167 = vadd.f32 0.0, %v166
    %v168 = vpop.f32.mrf.mxu0
    %v169 = vadd.f32 0.0, %v168
    %170 = vmatprep.mubr.f32.mxu0 0.0
    %171 = vmatmul.mubr.f32.gmra.mxu0 %v71
    %v172 = vpop.f32.mrf.mxu0
    %v173 = vadd.f32 0.0, %v172
    %v174 = vpop.f32.mrf.mxu0
    %v175 = vadd.f32 0.0, %v174
    %176 = vmatprep.mubr.f32.mxu0 0.0
    %177 = vmatmul.mubr.f32.gmra.mxu0 %v74
    %v178 = vpop.f32.mrf.mxu0
    %v179 = vadd.f32 0.0, %v178
    %v180 = vpop.f32.mrf.mxu0
    %v181 = vadd.f32 0.0, %v180
    %182 = vmatprep.mubr.f32.mxu0 0.0
    %183 = vmatmul.mubr.f32.gmra.mxu0 %v77
    %v184 = vpop.f32.mrf.mxu0
    %v185 = vadd.f32 0.0, %v184
    %v186 = vpop.f32.mrf.mxu0
    %v187 = vadd.f32 0.0, %v186
    %188 = vmatprep.mubr.f32.mxu0 0.0
    %189 = vmatmul.mubr.f32.gmra.mxu0 %v80
    %v190 = vpop.f32.mrf.mxu0
    %v191 = vadd.f32 0.0, %v190
    %v192 = vpop.f32.mrf.mxu0
    %v193 = vadd.f32 0.0, %v192
    %194 = vdwg.mxu0
    %vm195 = vcmask 261120
    %v197 = vsel %vm195, %v21, 0
    %v200 = vsel %vm195, %v22, 0
    %v203 = vsel %vm195, %v23, 0
    %v206 = vsel %vm195, %v24, 0
    %v209 = vsel %vm195, %v25, 0
    %v212 = vsel %vm195, %v26, 0
    %v215 = vsel %vm195, %v27, 0
    %v218 = vsel %vm195, %v28, 0
    %220 = vmatprep.subr.mxu0 0.0
    %221 = vmatpush1.msra.mxu0 0.0
    %222 = vmatprep.subr.mxu0 0.0
    %223 = vmatpush1.msra.mxu0 0.0
    %224 = vmatprep.subr.mxu0 0.0
    %225 = vmatpush1.msra.mxu0 0.0
    %226 = vmatprep.subr.mxu0 0.0
    %227 = vmatpush1.msra.mxu0 0.0
    %228 = vmatprep.subr.mxu0 0.0
    %229 = vmatpush1.msra.mxu0 0.0
    %230 = vmatprep.subr.mxu0 0.0
    %231 = vmatpush1.msra.mxu0 0.0
    %232 = vmatprep.subr.mxu0 0.0
    %233 = vmatpush1.msra.mxu0 0.0
    %234 = vmatprep.subr.mxu0 0.0
    %235 = vmatpush1.msra.mxu0 0.0
    %236 = vmatprep.subr.mxu0 0.0
    %237 = vmatpush1.msra.mxu0 0.0
    %238 = vmatprep.subr.mxu0 0.0
    %239 = vmatpush1.msra.mxu0 0.0
    %240 = vmatprep.subr.mxu0 0.0
    %241 = vmatpush1.msra.mxu0 0.0
    %242 = vmatprep.subr.mxu0 0.0
    %243 = vmatpush1.msra.mxu0 0.0
    %244 = vmatprep.subr.mxu0 %v36
    %245 = vmatpush1.msra.mxu0 %v35
    %246 = vmatprep.subr.mxu0 %v34
    %247 = vmatpush1.msra.mxu0 %v33
    %248 = vmatprep.subr.mxu0 %v32
    %249 = vmatpush1.msra.mxu0 %v31
    %250 = vmatprep.subr.mxu0 %v30
    %251 = vmatpush1.msra.mxu0 %v29
    %252 = vmatprep.subr.mxu0 0.0
    %253 = vmatpush2.msra.mxu0 0.0
    %254 = vmatprep.subr.mxu0 0.0
    %255 = vmatpush2.msra.mxu0 0.0
    %256 = vmatprep.subr.mxu0 0.0
    %257 = vmatpush2.msra.mxu0 0.0
    %258 = vmatprep.subr.mxu0 0.0
    %259 = vmatpush2.msra.mxu0 0.0
    %260 = vmatprep.subr.mxu0 0.0
    %261 = vmatpush2.msra.mxu0 0.0
    %262 = vmatprep.subr.mxu0 0.0
    %263 = vmatpush2.msra.mxu0 0.0
    %264 = vmatprep.subr.mxu0 0.0
    %265 = vmatpush2.msra.mxu0 0.0
    %266 = vmatprep.subr.mxu0 0.0
    %267 = vmatpush2.msra.mxu0 0.0
    %268 = vmatprep.subr.mxu0 0.0
    %269 = vmatpush2.msra.mxu0 0.0
    %270 = vmatprep.subr.mxu0 0.0
    %271 = vmatpush2.msra.mxu0 0.0
    %272 = vmatprep.subr.mxu0 0.0
    %273 = vmatpush2.msra.mxu0 0.0
    %274 = vmatprep.subr.mxu0 0.0
    %275 = vmatpush2.msra.mxu0 0.0
    %276 = vmatprep.subr.mxu0 0.0
    %277 = vmatpush2.msra.mxu0 0.0
    %278 = vmatprep.subr.mxu0 0.0
    %279 = vmatpush2.msra.mxu0 0.0
    %280 = vmatprep.subr.mxu0 0.0
    %281 = vmatpush2.msra.mxu0 0.0
    %282 = vmatprep.subr.mxu0 0.0
    %283 = vmatpush2.msra.mxu0 0.0
    %284 = vmatprep.mubr.f32.mxu0 0.0
    %285 = vmatmul.mubr.f32.gmra.mxu0 %v197
    %v286 = vpop.f32.mrf.mxu0
    %v287 = vadd.f32 %v149, %v286
    %v288 = vpop.f32.mrf.mxu0
    %v289 = vadd.f32 %v151, %v288
    %290 = vmatprep.mubr.f32.mxu0 0.0
    %291 = vmatmul.mubr.f32.gmra.mxu0 %v200
    %v292 = vpop.f32.mrf.mxu0
    %v293 = vadd.f32 %v155, %v292
    %v294 = vpop.f32.mrf.mxu0
    %v295 = vadd.f32 %v157, %v294
    %296 = vmatprep.mubr.f32.mxu0 0.0
    %297 = vmatmul.mubr.f32.gmra.mxu0 %v203
    %v298 = vpop.f32.mrf.mxu0
    %v299 = vadd.f32 %v161, %v298
    %v300 = vpop.f32.mrf.mxu0
    %v301 = vadd.f32 %v163, %v300
    %302 = vmatprep.mubr.f32.mxu0 0.0
    %303 = vmatmul.mubr.f32.gmra.mxu0 %v206
    %v304 = vpop.f32.mrf.mxu0
    %v305 = vadd.f32 %v167, %v304
    %v306 = vpop.f32.mrf.mxu0
    %v307 = vadd.f32 %v169, %v306
    %308 = vmatprep.mubr.f32.mxu0 0.0
    %309 = vmatmul.mubr.f32.gmra.mxu0 %v209
    %v310 = vpop.f32.mrf.mxu0
    %v311 = vadd.f32 %v173, %v310
    %v312 = vpop.f32.mrf.mxu0
    %v313 = vadd.f32 %v175, %v312
    %314 = vmatprep.mubr.f32.mxu0 0.0
    %315 = vmatmul.mubr.f32.gmra.mxu0 %v212
    %v316 = vpop.f32.mrf.mxu0
    %v317 = vadd.f32 %v179, %v316
    %v318 = vpop.f32.mrf.mxu0
    %v319 = vadd.f32 %v181, %v318
    %320 = vmatprep.mubr.f32.mxu0 0.0
    %321 = vmatmul.mubr.f32.gmra.mxu0 %v215
    %v322 = vpop.f32.mrf.mxu0
    %v323 = vadd.f32 %v185, %v322
    %v324 = vpop.f32.mrf.mxu0
    %v325 = vadd.f32 %v187, %v324
    %326 = vmatprep.mubr.f32.mxu0 0.0
    %327 = vmatmul.mubr.f32.gmra.mxu0 %v218
    %v328 = vpop.f32.mrf.mxu0
    %v329 = vadd.f32 %v191, %v328
    %v330 = vpop.f32.mrf.mxu0
    %v331 = vadd.f32 %v193, %v330
    %332 = vdwg.mxu0
    %v333 = vld [vmem:[%s4] sm:$0x3]
    %v335 = vlaneseq
    %v336 = vshrl.u32 %v335, 7
    %v337 = vsub.s32 0, %v336
    %v338 = vrot.slane %v333, %v337
    %v339 = vlaneseq
    %v340 = vshrl.u32 %v339, 7
    %v341 = vsub.s32 1, %v340
    %v342 = vrot.slane %v333, %v341
    %v345 = vadd.f32 %v287, %v338
    %v346 = vadd.f32 %v289, %v342
    %v347 = vadd.f32 %v293, %v338
    %v348 = vadd.f32 %v295, %v342
    %v349 = vadd.f32 %v299, %v338
    %v350 = vadd.f32 %v301, %v342
    %v351 = vadd.f32 %v305, %v338
    %v352 = vadd.f32 %v307, %v342
    %v353 = vadd.f32 %v311, %v338
    %v354 = vadd.f32 %v313, %v342
    %v355 = vadd.f32 %v317, %v338
    %v356 = vadd.f32 %v319, %v342
    %v357 = vadd.f32 %v323, %v338
    %v358 = vadd.f32 %v325, %v342
    %v359 = vadd.f32 %v329, %v338
    %v360 = vadd.f32 %v331, %v342
    %361 = vst [vmem:[#allocation2] sm:$0xff] %v345
    %362 = vst [vmem:[#allocation2 + $0x8] sm:$0xff] %v346
    %363 = vst [vmem:[#allocation2 + $0x10] sm:$0xff] %v347
    %364 = vst [vmem:[#allocation2 + $0x18] sm:$0xff] %v348
    %365 = vst [vmem:[#allocation2 + $0x20] sm:$0xff] %v349
    %366 = vst [vmem:[#allocation2 + $0x28] sm:$0xff] %v350
    %367 = vst [vmem:[#allocation2 + $0x30] sm:$0xff] %v351
    %368 = vst [vmem:[#allocation2 + $0x38] sm:$0xff] %v352
    %369 = vst [vmem:[#allocation2 + $0x40] sm:$0xff] %v353
    %370 = vst [vmem:[#allocation2 + $0x48] sm:$0xff] %v354
    %371 = vst [vmem:[#allocation2 + $0x50] sm:$0xff] %v355
    %372 = vst [vmem:[#allocation2 + $0x58] sm:$0xff] %v356
    %373 = vst [vmem:[#allocation2 + $0x60] sm:$0xff] %v357
    %374 = vst [vmem:[#allocation2 + $0x68] sm:$0xff] %v358
    %375 = vst [vmem:[#allocation2 + $0x70] sm:$0xff] %v359
    %376 = vst [vmem:[#allocation2 + $0x78] sm:$0xff] %v360
    // Predicated region
    $region22: #{tpu_custom_call.1} parent=1 // pred_check
      _
    $region23: #{tpu_custom_call.1} parent=1 // pred_check_branch
      %378 = sbr.rel (0) target = $region25
    $region24: #{tpu_custom_call.1} parent=1 // pred_region
      %s380 = ssub.s32 2048, 2048
      %381 = vsyncadd [#allocation3], %s380
      %s382 = sshll.u32 [#allocation2], 4
      %s383 = int_to_ptr.vmem [resolvable:$true] %s382
      %388 = dma.vmem_to_hbm [thread:$0]  %s383, 2048, %s5, [#allocation3], 256, 256, 16
    $region25: #{tpu_custom_call.1} parent=1 // pred_fallthru
      _
    // Predicated region
    $region26: #{tpu_custom_call.1} parent=1 // pred_check
      _
    $region27: #{tpu_custom_call.1} parent=1 // pred_check_branch
      %390 = sbr.rel (0) target = $region29
    $region28: #{tpu_custom_call.1} parent=1 // pred_region
      %391 = dma.done [#allocation3], 2048
    $region29: #{tpu_custom_call.1} parent=1 // pred_fallthru
      _
    %392 = vsyncpa [#allocation3], 1

</llo_original>
